<compile_context>
chip_gen: v7x
topology: tpu7x:2x2x1
jax: 0.10.0
libtpu: 0.0.40
codegen_flags: <defaults>
</compile_context>

<pallas_src>
import jax
import jax.numpy as jnp
from jax.experimental import pallas as pl
from jax.experimental.pallas import tpu as pltpu

HIDDEN = 50     # logical hidden width of the PyTorch MLP
LANE = 128      # TPU lane width
SUBLANE = 8


def _round_up(n, m):
    return ((n + m - 1) // m) * m


def _cdiv(a, b):
    return -(-a // b)


# ---------------------------------------------------------------------------
# Kernel: one batch tile (tb lanes wide), everything else VMEM-resident.
# Features live on the sublane axis, batch on the lane axis.
# ---------------------------------------------------------------------------
def mlp_kernel(x_ref, w1_ref, b1_ref, w2_ref, b2_ref, w3_ref, b3_ref, o_ref):
    xT = x_ref[...]                                   # (k_pad, tb), bf16 or f32

    # Layer 1: Linear + ReLU   (padded hidden rows are exact zeros -> inert)
    h1 = jnp.dot(w1_ref[...], xT, preferred_element_type=jnp.float32)
    h1 = jnp.maximum(h1 + b1_ref[...], 0.0)           # (h_pad, tb) f32
    h1 = h1.astype(w2_ref.dtype)

    # Layer 2: Linear + ReLU
    h2 = jnp.dot(w2_ref[...], h1, preferred_element_type=jnp.float32)
    h2 = jnp.maximum(h2 + b2_ref[...], 0.0)
    h2 = h2.astype(w3_ref.dtype)

    # Layer 3: Linear (no activation); compact (n_pad, tb) lane-dense store
    out = jnp.dot(w3_ref[...], h2, preferred_element_type=jnp.float32)
    o_ref[...] = (out + b3_ref[...]).astype(o_ref.dtype)


# ---------------------------------------------------------------------------
# Parameter preparation: transpose + zero-pad once, reuse across calls.
# ---------------------------------------------------------------------------
def prepare_params(params, *, use_bf16=True):
    """Transpose weights to [out, in] and zero-pad to TPU-friendly shapes.
    Pads are exact zeros, so ReLU(0)=0 keeps padded rows/columns inert."""
    w1, b1 = params["w1"], params["b1"]   # w: [in, out]
    w2, b2 = params["w2"], params["b2"]
    w3, b3 = params["w3"], params["b3"]
    opt_n, hidden = w1.shape
    act_n = w3.shape[1]

    k_pad = _round_up(opt_n, 16)          # 16: safe for bf16 sublane packing
    h_pad = _round_up(hidden, 16)         # 50 -> 64
    n_pad = _round_up(act_n, SUBLANE)     # 2  -> 8

    wdt = jnp.bfloat16 if use_bf16 else jnp.float32
    w1t = jnp.zeros((h_pad, k_pad), jnp.float32).at[:hidden, :opt_n].set(w1.T).astype(wdt)
    w2t = jnp.zeros((h_pad, h_pad), jnp.float32).at[:hidden, :hidden].set(w2.T).astype(wdt)
    w3t = jnp.zeros((n_pad, h_pad), jnp.float32).at[:act_n, :hidden].set(w3.T).astype(wdt)
    # biases stay f32 (added to the f32 accumulators), broadcast over lanes
    b1p = jnp.zeros((h_pad, 1), jnp.float32).at[:hidden, 0].set(b1)
    b2p = jnp.zeros((h_pad, 1), jnp.float32).at[:hidden, 0].set(b2)
    b3p = jnp.zeros((n_pad, 1), jnp.float32).at[:act_n, 0].set(b3)

    return dict(w1t=w1t, b1=b1p, w2t=w2t, b2=b2p, w3t=w3t, b3=b3p,
                opt_n=opt_n, act_n=act_n,
                k_pad=k_pad, h_pad=h_pad, n_pad=n_pad,
                x_dtype=wdt, w_itemsize=(2 if use_bf16 else 4))


def _choose_batch_tile(B, batch_tile):
    """>=1 full 128-lane tile; aim for >=4 grid steps when the batch allows so
    a v7x megacore (2 TCs) keeps >=2 tiles per core and can double-buffer."""
    target = max(LANE, _round_up(_cdiv(B, 4), LANE))
    return max(LANE, min(batch_tile, target))


# ---------------------------------------------------------------------------
# Wrapper
# ---------------------------------------------------------------------------
def mlp_forward_pallas(x, prep, *, batch_tile=2048):
    """x: [B, opt_n] float32. Returns [B, act_n] float32."""
    B, opt_n = x.shape
    assert opt_n == prep["opt_n"]
    k_pad, h_pad, n_pad = prep["k_pad"], prep["h_pad"], prep["n_pad"]
    act_n = prep["act_n"]
    x_dtype = prep["x_dtype"]

    tb = _choose_batch_tile(B, batch_tile)
    b_pad = _round_up(B, tb)

    # x^T: batch on the lane axis (dense 128-lane tiles), features on sublanes.
    # Built directly in the MXU input dtype (bf16 on the fast path).
    xT = jnp.zeros((k_pad, b_pad), x_dtype).at[:opt_n, :B].set(x.T.astype(x_dtype))

    const = lambda i: (0, 0)   # weights/biases: same block every step -> resident

    # Explicit VMEM budget: double-buffered x/out blocks, f32 intermediates,
    # resident weights; generous margin, capped at v7x's 64 MiB physical VMEM.
    vmem_need = (2 * tb * (k_pad * prep["w_itemsize"] + n_pad * 4)
                 + 3 * h_pad * tb * 4
                 + 2 * (h_pad * (k_pad + h_pad) + n_pad * h_pad) * prep["w_itemsize"]
                 + 2 * (2 * h_pad + n_pad) * 4)
    vmem_limit = int(min(64 * 2**20, max(4 * vmem_need, 16 * 2**20)))

    out_t = pl.pallas_call(
        mlp_kernel,
        out_shape=jax.ShapeDtypeStruct((n_pad, b_pad), jnp.float32),
        grid=(b_pad // tb,),
        in_specs=[
            pl.BlockSpec((k_pad, tb), lambda i: (0, i)),   # x^T : batch-tiled on lanes
            pl.BlockSpec((h_pad, k_pad), const),           # W1^T (VMEM-resident)
            pl.BlockSpec((h_pad, 1), const),               # b1
            pl.BlockSpec((h_pad, h_pad), const),           # W2^T
            pl.BlockSpec((h_pad, 1), const),               # b2
            pl.BlockSpec((n_pad, h_pad), const),           # W3^T
            pl.BlockSpec((n_pad, 1), const),               # b3
        ],
        out_specs=pl.BlockSpec((n_pad, tb), lambda i: (0, i)),
        compiler_params=pltpu.CompilerParams(
            dimension_semantics=("parallel",),             # megacore on v7x
            vmem_limit_bytes=vmem_limit),
    )(xT, prep["w1t"], prep["b1"], prep["w2t"], prep["b2"], prep["w3t"], prep["b3"])

    # Compact (n_pad=8, b_pad) f32 output: this slice/transpose touches ~40 B
    # per row instead of the previous 520 B; fuses into the consumer under jit.
    return out_t[:act_n, :B].T


def mlp_reference(x, p):
    h1 = jnp.maximum(x @ p["w1"] + p["b1"], 0.0)
    h2 = jnp.maximum(h1 @ p["w2"] + p["b2"], 0.0)
    return h2 @ p["w3"] + p["b3"]


def init_params(key, opt_n, act_n, hidden=HIDDEN):
    """Deterministic synthetic init (PyTorch-like uniform fan-in scaling).
    Weights stored as [in_features, out_features]."""
    ks = jax.random.split(key, 6)

    def lin(kw, kb, fan_in, fan_out):
        bound = 1.0 / jnp.sqrt(fan_in)
        w = jax.random.uniform(kw, (fan_in, fan_out), jnp.float32, -bound, bound)
        b = jax.random.uniform(kb, (fan_out,), jnp.float32, -bound, bound)
        return w, b

    w1, b1 = lin(ks[0], ks[1], opt_n, hidden)
    w2, b2 = lin(ks[2], ks[3], hidden, hidden)
    w3, b3 = lin(ks[4], ks[5], hidden, act_n)
    return {"w1": w1, "b1": b1, "w2": w2, "b2": b2, "w3": w3, "b3": b3}


if __name__ == "__main__":
    key = jax.random.PRNGKey(0)
    k_param, k_xs, k_xb = jax.random.split(key, 3)

    B, opt_n, act_n = 2, 4, 2   # CartPole-like: 4 observations, 2 actions
    params = init_params(k_param, opt_n, act_n)

    # --- small batch, f32 weights: tight correctness check vs pure-JAX ref ---
    x_small = jax.random.normal(k_xs, (B, opt_n), jnp.float32)
    prep_f32 = prepare_params(params, use_bf16=False)      # built once, reused
    fwd_small = jax.jit(lambda xx: mlp_forward_pallas(xx, prep_f32))
    out_small = jax.block_until_ready(fwd_small(x_small))
    ref_small = mlp_reference(x_small, params)
    assert out_small.shape == (B, act_n)
    assert jnp.allclose(out_small, ref_small, atol=1e-4, rtol=1e-4)

    # --- larger batch: perf-representative path (batch grid + bf16 MXU) ---
    Bb = 2048
    x_big = jax.random.normal(k_xb, (Bb, opt_n), jnp.float32)
    prep_bf16 = prepare_params(params, use_bf16=True)       # built once, reused
    fwd_big = jax.jit(lambda xx: mlp_forward_pallas(xx, prep_bf16))
    out_big = jax.block_until_ready(fwd_big(x_big))
    ref_big = mlp_reference(x_big, params)
    assert out_big.shape == (Bb, act_n)
    assert jnp.allclose(out_big, ref_big, atol=5e-2, rtol=5e-2)

    print("KERNEL_OK")
</pallas_src>

<mosaic_0001>
module attributes {stable_mosaic.version = 11 : i64} {
  func.func @mlp_kernel(%arg0: i32, %arg1: memref<16x128xf32, #tpu.memory_space<vmem>>, %arg2: memref<64x16xf32, #tpu.memory_space<vmem>>, %arg3: memref<64x1xf32, #tpu.memory_space<vmem>>, %arg4: memref<64x64xf32, #tpu.memory_space<vmem>>, %arg5: memref<64x1xf32, #tpu.memory_space<vmem>>, %arg6: memref<8x64xf32, #tpu.memory_space<vmem>>, %arg7: memref<8x1xf32, #tpu.memory_space<vmem>>, %arg8: memref<8x128xf32, #tpu.memory_space<vmem>>) attributes {dimension_semantics = [#tpu.dimension_semantics<parallel>], iteration_bounds = array<i64: 1>, scalar_prefetch = 0 : i64, scratch_operands = 0 : i64, tpu.core_type = #tpu.core_type<tc>, window_params = [{transform_indices = @transform_0, window_bounds = array<i64: 16, 128>}, {pipeline_mode = #tpu.pipeline_mode<synchronous>, transform_indices = @transform_1, window_bounds = array<i64: 64, 16>}, {pipeline_mode = #tpu.pipeline_mode<synchronous>, transform_indices = @transform_2, window_bounds = array<i64: 64, 1>}, {pipeline_mode = #tpu.pipeline_mode<synchronous>, transform_indices = @transform_3, window_bounds = array<i64: 64, 64>}, {pipeline_mode = #tpu.pipeline_mode<synchronous>, transform_indices = @transform_4, window_bounds = array<i64: 64, 1>}, {pipeline_mode = #tpu.pipeline_mode<synchronous>, transform_indices = @transform_5, window_bounds = array<i64: 8, 64>}, {pipeline_mode = #tpu.pipeline_mode<synchronous>, transform_indices = @transform_6, window_bounds = array<i64: 8, 1>}, {transform_indices = @transform_7, window_bounds = array<i64: 8, 128>}]} {
    %c0 = arith.constant 0 : index
    %c0_0 = arith.constant 0 : index
    %0 = vector.load %arg1[%c0, %c0_0] : memref<16x128xf32, #tpu.memory_space<vmem>>, vector<16x128xf32>
    %c0_1 = arith.constant 0 : index
    %c0_2 = arith.constant 0 : index
    %1 = vector.load %arg2[%c0_1, %c0_2] : memref<64x16xf32, #tpu.memory_space<vmem>>, vector<64x16xf32>
    %cst = arith.constant dense<0.000000e+00> : vector<64x128xf32>
    %2 = tpu.matmul %1, %0, %cst {dimension_numbers = #tpu.dot_dimension_numbers<[1], [0], [0], [1], [0, 0, 1, 1], [], []>} : vector<64x16xf32>, vector<16x128xf32>, vector<64x128xf32> -> vector<64x128xf32>
    %c0_3 = arith.constant 0 : index
    %c0_4 = arith.constant 0 : index
    %3 = vector.load %arg3[%c0_3, %c0_4] : memref<64x1xf32, #tpu.memory_space<vmem>>, vector<64x1xf32>
    %4 = vector.broadcast %3 : vector<64x1xf32> to vector<64x128xf32>
    %5 = arith.addf %2, %4 : vector<64x128xf32>
    %cst_5 = arith.constant 0.000000e+00 : f32
    %6 = vector.broadcast %cst_5 : f32 to vector<64x128xf32>
    %7 = arith.maximumf %5, %6 : vector<64x128xf32>
    %c0_6 = arith.constant 0 : index
    %c0_7 = arith.constant 0 : index
    %8 = vector.load %arg4[%c0_6, %c0_7] : memref<64x64xf32, #tpu.memory_space<vmem>>, vector<64x64xf32>
    %cst_8 = arith.constant dense<0.000000e+00> : vector<64x128xf32>
    %9 = tpu.matmul %8, %7, %cst_8 {dimension_numbers = #tpu.dot_dimension_numbers<[1], [0], [0], [1], [0, 0, 1, 1], [], []>} : vector<64x64xf32>, vector<64x128xf32>, vector<64x128xf32> -> vector<64x128xf32>
    %c0_9 = arith.constant 0 : index
    %c0_10 = arith.constant 0 : index
    %10 = vector.load %arg5[%c0_9, %c0_10] : memref<64x1xf32, #tpu.memory_space<vmem>>, vector<64x1xf32>
    %11 = vector.broadcast %10 : vector<64x1xf32> to vector<64x128xf32>
    %12 = arith.addf %9, %11 : vector<64x128xf32>
    %cst_11 = arith.constant 0.000000e+00 : f32
    %13 = vector.broadcast %cst_11 : f32 to vector<64x128xf32>
    %14 = arith.maximumf %12, %13 : vector<64x128xf32>
    %c0_12 = arith.constant 0 : index
    %c0_13 = arith.constant 0 : index
    %15 = vector.load %arg6[%c0_12, %c0_13] : memref<8x64xf32, #tpu.memory_space<vmem>>, vector<8x64xf32>
    %cst_14 = arith.constant dense<0.000000e+00> : vector<8x128xf32>
    %16 = tpu.matmul %15, %14, %cst_14 {dimension_numbers = #tpu.dot_dimension_numbers<[1], [0], [0], [1], [0, 0, 1, 1], [], []>} : vector<8x64xf32>, vector<64x128xf32>, vector<8x128xf32> -> vector<8x128xf32>
    %c0_15 = arith.constant 0 : index
    %c0_16 = arith.constant 0 : index
    %17 = vector.load %arg7[%c0_15, %c0_16] : memref<8x1xf32, #tpu.memory_space<vmem>>, vector<8x1xf32>
    %18 = vector.broadcast %17 : vector<8x1xf32> to vector<8x128xf32>
    %19 = arith.addf %16, %18 : vector<8x128xf32>
    %c0_17 = arith.constant 0 : index
    %c0_18 = arith.constant 0 : index
    %20 = vector.load %arg8[%c0_17, %c0_18] : memref<8x128xf32, #tpu.memory_space<vmem>>, vector<8x128xf32>
    tpu.vector_store %arg8[%c0_17, %c0_18], %19 {strides = array<i32>} : memref<8x128xf32, #tpu.memory_space<vmem>>, vector<8x128xf32>,
    return
  }
  func.func @transform_0(%arg0: i32) -> (i32, i32) {
    %c0_i32 = arith.constant 0 : i32
    %c0_i32_0 = arith.constant 0 : i32
    return %c0_i32, %arg0 : i32, i32
  }
  func.func @transform_1(%arg0: i32) -> (i32, i32) {
    %c0_i32 = arith.constant 0 : i32
    %c0_i32_0 = arith.constant 0 : i32
    %c0_i32_1 = arith.constant 0 : i32
    return %c0_i32, %c0_i32_0 : i32, i32
  }
  func.func @transform_2(%arg0: i32) -> (i32, i32) {
    %c0_i32 = arith.constant 0 : i32
    %c0_i32_0 = arith.constant 0 : i32
    %c0_i32_1 = arith.constant 0 : i32
    return %c0_i32, %c0_i32_0 : i32, i32
  }
  func.func @transform_3(%arg0: i32) -> (i32, i32) {
    %c0_i32 = arith.constant 0 : i32
    %c0_i32_0 = arith.constant 0 : i32
    %c0_i32_1 = arith.constant 0 : i32
    return %c0_i32, %c0_i32_0 : i32, i32
  }
  func.func @transform_4(%arg0: i32) -> (i32, i32) {
    %c0_i32 = arith.constant 0 : i32
    %c0_i32_0 = arith.constant 0 : i32
    %c0_i32_1 = arith.constant 0 : i32
    return %c0_i32, %c0_i32_0 : i32, i32
  }
  func.func @transform_5(%arg0: i32) -> (i32, i32) {
    %c0_i32 = arith.constant 0 : i32
    %c0_i32_0 = arith.constant 0 : i32
    %c0_i32_1 = arith.constant 0 : i32
    return %c0_i32, %c0_i32_0 : i32, i32
  }
  func.func @transform_6(%arg0: i32) -> (i32, i32) {
    %c0_i32 = arith.constant 0 : i32
    %c0_i32_0 = arith.constant 0 : i32
    %c0_i32_1 = arith.constant 0 : i32
    return %c0_i32, %c0_i32_0 : i32, i32
  }
  func.func @transform_7(%arg0: i32) -> (i32, i32) {
    %c0_i32 = arith.constant 0 : i32
    %c0_i32_0 = arith.constant 0 : i32
    return %c0_i32, %arg0 : i32, i32
  }
}

</mosaic_0001>

<llo_original>
// kernel: _lambda_.1
$region0: #{_lambda_.1}
  #allocation0 [shape = 'u32[]', space=smem, size = 0x4, offset = 0x4, fixed_abs, tag = 'smem constant byte address 0x4 - core index']
  #allocation1 [shape = 'u32[144,128]{1,0:T(1,128)}', space=vmem, size = 0x12000, scoped, tag = 'internal scratch']
  %s0 = inlined_call_operand.vmem [shape: f32[16,128], index: 0, kind: input, shape index: {}]
  %s1 = inlined_call_operand.hbm [shape: f32[64,16], index: 1, kind: input, shape index: {}]
  %s2 = inlined_call_operand.hbm [shape: f32[64,1], index: 2, kind: input, shape index: {}]
  %s3 = inlined_call_operand.hbm [shape: f32[64,64], index: 3, kind: input, shape index: {}]
  %s4 = inlined_call_operand.hbm [shape: f32[64,1], index: 4, kind: input, shape index: {}]
  %s5 = inlined_call_operand.vmem [shape: f32[8,64], index: 5, kind: input, shape index: {}]
  %s6 = inlined_call_operand.vmem [shape: f32[8,1], index: 6, kind: input, shape index: {}]
  %s7 = inlined_call_operand.vmem [shape: f32[8,128], index: 7, kind: output, shape index: {}]
  %s8 = sld [smem:[#allocation0]]
  $region54: #{_lambda_.1} parent=0
    _
  %s10 = ssub.s32 1, %s8
  %s11 = scalar_select 0, %s10, %s8
  $region1: #{_lambda_.1} parent=0
    #allocation2 [shape = 'u8[32768]{0}', space=vmem, size = 0x8000, scoped, tag = 'input window, operand 1, single buffered']
    #allocation3 [shape = 's32[1]{0}', space=sflag, size = 0x4, scoped, tag = 'scoped memory for _lambda_.1']
    #allocation4 [shape = 'u8[32768]{0}', space=vmem, size = 0x8000, scoped, tag = 'input window, operand 2, single buffered']
    #allocation5 [shape = 's32[1]{0}', space=sflag, size = 0x4, scoped, tag = 'scoped memory for _lambda_.1']
    #allocation6 [shape = 'u8[32768]{0}', space=vmem, size = 0x8000, scoped, tag = 'input window, operand 3, single buffered']
    #allocation7 [shape = 'u8[32768]{0}', space=vmem, size = 0x8000, scoped, tag = 'input window, operand 4, single buffered']
    #allocation8 [shape = 's32[1]{0}', space=sflag, size = 0x4, scoped, tag = 'scoped memory for _lambda_.1']
    %12 = vsyncpa [#allocation3], 0
    %13 = vsyncpa [#allocation5], 0
    %14 = vsyncpa [#allocation8], 0
    // Predicated region
    $region2: #{_lambda_.1} parent=1 // pred_check
      _
    $region3: #{_lambda_.1} parent=1 // pred_check_branch
      %16 = sbr.rel (0) target = $region5
    $region4: #{_lambda_.1} parent=1 // pred_region
      _
    $region5: #{_lambda_.1} parent=1 // pred_fallthru
      _
    // Predicated region
    $region6: #{_lambda_.1} parent=1 // pred_check
      _
    $region7: #{_lambda_.1} parent=1 // pred_check_branch
      %18 = sbr.rel (0) target = $region9
    $region8: #{_lambda_.1} parent=1 // pred_region
      %s20 = ssub.s32 1024, 1024
      %21 = vsyncadd [#allocation3], %s20
      %s22 = sshll.u32 [#allocation2], 4
      %s23 = int_to_ptr.vmem [resolvable:$true] %s22
      %28 = dma.hbm_to_vmem [thread:$0]  %s1, 1024, %s23, [#allocation3], 128, 128, 8
    $region9: #{_lambda_.1} parent=1 // pred_fallthru
      _
    // Predicated region
    $region10: #{_lambda_.1} parent=1 // pred_check
      _
    $region11: #{_lambda_.1} parent=1 // pred_check_branch
      %30 = sbr.rel (0) target = $region13
    $region12: #{_lambda_.1} parent=1 // pred_region
      %s32 = ssub.s32 1024, 1024
      %33 = vsyncadd [#allocation5], %s32
      %s34 = sshll.u32 [#allocation4], 4
      %s35 = int_to_ptr.vmem [resolvable:$true] %s34
      %40 = dma.hbm_to_vmem [thread:$0]  %s2, 1024, %s35, [#allocation5], 128, 128, 8
    $region13: #{_lambda_.1} parent=1 // pred_fallthru
      _
    // Predicated region
    $region14: #{_lambda_.1} parent=1 // pred_check
      _
    $region15: #{_lambda_.1} parent=1 // pred_check_branch
      %42 = sbr.rel (0) target = $region17
    $region16: #{_lambda_.1} parent=1 // pred_region
      %s44 = ssub.s32 1024, 1024
      %45 = vsyncadd [#allocation5], %s44
      %s46 = sshll.u32 [#allocation6], 4
      %s47 = int_to_ptr.vmem [resolvable:$true] %s46
      %52 = dma.hbm_to_vmem [thread:$0]  %s3, 1024, %s47, [#allocation5], 128, 128, 8
    $region17: #{_lambda_.1} parent=1 // pred_fallthru
      _
    // Predicated region
    $region18: #{_lambda_.1} parent=1 // pred_check
      _
    $region19: #{_lambda_.1} parent=1 // pred_check_branch
      %54 = sbr.rel (0) target = $region21
    $region20: #{_lambda_.1} parent=1 // pred_region
      %s56 = ssub.s32 1024, 1024
      %57 = vsyncadd [#allocation8], %s56
      %s58 = sshll.u32 [#allocation7], 4
      %s59 = int_to_ptr.vmem [resolvable:$true] %s58
      %64 = dma.hbm_to_vmem [thread:$0]  %s4, 1024, %s59, [#allocation8], 128, 128, 8
    $region21: #{_lambda_.1} parent=1 // pred_fallthru
      _
    // Predicated region
    $region22: #{_lambda_.1} parent=1 // pred_check
      _
    $region23: #{_lambda_.1} parent=1 // pred_check_branch
      %66 = sbr.rel (0) target = $region25
    $region24: #{_lambda_.1} parent=1 // pred_region
      _
    $region25: #{_lambda_.1} parent=1 // pred_fallthru
      _
    // Predicated region
    $region26: #{_lambda_.1} parent=1 // pred_check
      _
    $region27: #{_lambda_.1} parent=1 // pred_check_branch
      %68 = sbr.rel (0) target = $region29
    $region28: #{_lambda_.1} parent=1 // pred_region
      _
    $region29: #{_lambda_.1} parent=1 // pred_fallthru
      _
    // Predicated region
    $region30: #{_lambda_.1} parent=1 // pred_check
      _
    $region31: #{_lambda_.1} parent=1 // pred_check_branch
      %70 = sbr.rel (0) target = $region33
    $region32: #{_lambda_.1} parent=1 // pred_region
      %71 = dma.done [#allocation3], 1024
    $region33: #{_lambda_.1} parent=1 // pred_fallthru
      _
    // Predicated region
    $region34: #{_lambda_.1} parent=1 // pred_check
      _
    $region35: #{_lambda_.1} parent=1 // pred_check_branch
      %73 = sbr.rel (0) target = $region37
    $region36: #{_lambda_.1} parent=1 // pred_region
      %74 = dma.done [#allocation5], 1024
    $region37: #{_lambda_.1} parent=1 // pred_fallthru
      _
    // Predicated region
    $region38: #{_lambda_.1} parent=1 // pred_check
      _
    $region39: #{_lambda_.1} parent=1 // pred_check_branch
      %76 = sbr.rel (0) target = $region41
    $region40: #{_lambda_.1} parent=1 // pred_region
      %77 = dma.done [#allocation5], 1024
    $region41: #{_lambda_.1} parent=1 // pred_fallthru
      _
    // Predicated region
    $region42: #{_lambda_.1} parent=1 // pred_check
      _
    $region43: #{_lambda_.1} parent=1 // pred_check_branch
      %79 = sbr.rel (0) target = $region45
    $region44: #{_lambda_.1} parent=1 // pred_region
      %80 = dma.done [#allocation8], 1024
    $region45: #{_lambda_.1} parent=1 // pred_fallthru
      _
    %v81 = vld [vmem:[%s0] sm:$0xff]
    %v82 = vld [vmem:[%s0 + $0x8] sm:$0xff]
    %v83 = vld [vmem:[#allocation2] sm:$0xff]
    %v84 = vld [vmem:[#allocation2 + $0x8] sm:$0xff]
    %v85 = vld [vmem:[#allocation2 + $0x10] sm:$0xff]
    %v86 = vld [vmem:[#allocation2 + $0x18] sm:$0xff]
    %v87 = vld [vmem:[#allocation2 + $0x20] sm:$0xff]
    %v88 = vld [vmem:[#allocation2 + $0x28] sm:$0xff]
    %v89 = vld [vmem:[#allocation2 + $0x30] sm:$0xff]
    %v90 = vld [vmem:[#allocation2 + $0x38] sm:$0xff]
    %v91 = vld [vmem:[#allocation4] sm:$0xff]
    %v92 = vld [vmem:[#allocation4 + $0x8] sm:$0xff]
    %v93 = vld [vmem:[#allocation4 + $0x10] sm:$0xff]
    %v94 = vld [vmem:[#allocation4 + $0x18] sm:$0xff]
    %v95 = vld [vmem:[#allocation4 + $0x20] sm:$0xff]
    %v96 = vld [vmem:[#allocation4 + $0x28] sm:$0xff]
    %v97 = vld [vmem:[#allocation4 + $0x30] sm:$0xff]
    %v98 = vld [vmem:[#allocation4 + $0x38] sm:$0xff]
    %100 = vset.pattern.permute.xlu0 0
    %101 = vperm.xlu0 %100, %v91
    %v102 = vpop.permute.xlu0 %101
    %105 = vset.pattern.permute.xlu0 0
    %106 = vperm.xlu0 %105, %v92
    %v107 = vpop.permute.xlu0 %106
    %110 = vset.pattern.permute.xlu0 0
    %111 = vperm.xlu0 %110, %v93
    %v112 = vpop.permute.xlu0 %111
    %115 = vset.pattern.permute.xlu0 0
    %116 = vperm.xlu0 %115, %v94
    %v117 = vpop.permute.xlu0 %116
    %120 = vset.pattern.permute.xlu0 0
    %121 = vperm.xlu0 %120, %v95
    %v122 = vpop.permute.xlu0 %121
    %125 = vset.pattern.permute.xlu0 0
    %126 = vperm.xlu0 %125, %v96
    %v127 = vpop.permute.xlu0 %126
    %130 = vset.pattern.permute.xlu0 0
    %131 = vperm.xlu0 %130, %v97
    %v132 = vpop.permute.xlu0 %131
    %135 = vset.pattern.permute.xlu0 0
    %136 = vperm.xlu0 %135, %v98
    %v137 = vpop.permute.xlu0 %136
    %vm139 = vcmask 130048
    %v141 = vsel %vm139, %v83, 0
    %v144 = vsel %vm139, %v84, 0
    %v147 = vsel %vm139, %v85, 0
    %v150 = vsel %vm139, %v86, 0
    %v153 = vsel %vm139, %v87, 0
    %v156 = vsel %vm139, %v88, 0
    %v159 = vsel %vm139, %v89, 0
    %v162 = vsel %vm139, %v90, 0
    %164 = vmatprep.subr.mxu0 0.0
    %165 = vmatpush1.msra.mxu0 %v81
    %166 = vmatprep.subr.mxu0 0.0
    %167 = vmatpush1.msra.mxu0 %v82
    %168 = vmatprep.subr.mxu0 0.0
    %169 = vmatpush1.msra.mxu0 0.0
    %170 = vmatprep.subr.mxu0 0.0
    %171 = vmatpush1.msra.mxu0 0.0
    %172 = vmatprep.subr.mxu0 0.0
    %173 = vmatpush1.msra.mxu0 0.0
    %174 = vmatprep.subr.mxu0 0.0
    %175 = vmatpush1.msra.mxu0 0.0
    %176 = vmatprep.subr.mxu0 0.0
    %177 = vmatpush1.msra.mxu0 0.0
    %178 = vmatprep.subr.mxu0 0.0
    %179 = vmatpush1.msra.mxu0 0.0
    %180 = vmatprep.subr.mxu0 0.0
    %181 = vmatpush1.msra.mxu0 0.0
    %182 = vmatprep.subr.mxu0 0.0
    %183 = vmatpush1.msra.mxu0 0.0
    %184 = vmatprep.subr.mxu0 0.0
    %185 = vmatpush1.msra.mxu0 0.0
    %186 = vmatprep.subr.mxu0 0.0
    %187 = vmatpush1.msra.mxu0 0.0
    %188 = vmatprep.subr.mxu0 0.0
    %189 = vmatpush1.msra.mxu0 0.0
    %190 = vmatprep.subr.mxu0 0.0
    %191 = vmatpush1.msra.mxu0 0.0
    %192 = vmatprep.subr.mxu0 0.0
    %193 = vmatpush1.msra.mxu0 0.0
    %194 = vmatprep.subr.mxu0 0.0
    %195 = vmatpush1.msra.mxu0 0.0
    %196 = vmatprep.subr.mxu0 0.0
    %197 = vmatpush1.msra.mxu0 0.0
    %198 = vmatprep.subr.mxu0 0.0
    %199 = vmatpush1.msra.mxu0 0.0
    %200 = vmatprep.subr.mxu0 0.0
    %201 = vmatpush1.msra.mxu0 0.0
    %202 = vmatprep.subr.mxu0 0.0
    %203 = vmatpush1.msra.mxu0 0.0
    %204 = vmatprep.subr.mxu0 0.0
    %205 = vmatpush1.msra.mxu0 0.0
    %206 = vmatprep.subr.mxu0 0.0
    %207 = vmatpush1.msra.mxu0 0.0
    %208 = vmatprep.subr.mxu0 0.0
    %209 = vmatpush1.msra.mxu0 0.0
    %210 = vmatprep.subr.mxu0 0.0
    %211 = vmatpush1.msra.mxu0 0.0
    %212 = vmatprep.subr.mxu0 0.0
    %213 = vmatpush1.msra.mxu0 0.0
    %214 = vmatprep.subr.mxu0 0.0
    %215 = vmatpush1.msra.mxu0 0.0
    %216 = vmatprep.subr.mxu0 0.0
    %217 = vmatpush1.msra.mxu0 0.0
    %218 = vmatprep.subr.mxu0 0.0
    %219 = vmatpush1.msra.mxu0 0.0
    %220 = vmatprep.subr.mxu0 0.0
    %221 = vmatpush1.msra.mxu0 0.0
    %222 = vmatprep.subr.mxu0 0.0
    %223 = vmatpush1.msra.mxu0 0.0
    %224 = vmatprep.subr.mxu0 0.0
    %225 = vmatpush1.msra.mxu0 0.0
    %226 = vmatprep.subr.mxu0 0.0
    %227 = vmatpush1.msra.mxu0 0.0
    %228 = vmatprep.mubr.f32.mxu0 0.0
    %229 = vmatmul.mubr.f32.gmra.mrb[0].mxu0 %v141
    %v230 = vpop.f32.mrb[0].mxu0
    %v231 = vadd.f32 %v102, %v230
    %v232 = vpop.f32.mrb[0].mxu0
    %233 = vmatprep.mubr.f32.mxu0 0.0
    %234 = vmatmul.mubr.f32.gmra.mrb[0].mxu0 %v144
    %v235 = vpop.f32.mrb[0].mxu0
    %v236 = vadd.f32 %v107, %v235
    %v237 = vpop.f32.mrb[0].mxu0
    %238 = vmatprep.mubr.f32.mxu0 0.0
    %239 = vmatmul.mubr.f32.gmra.mrb[0].mxu0 %v147
    %v240 = vpop.f32.mrb[0].mxu0
    %v241 = vadd.f32 %v112, %v240
    %v242 = vpop.f32.mrb[0].mxu0
    %243 = vmatprep.mubr.f32.mxu0 0.0
    %244 = vmatmul.mubr.f32.gmra.mrb[0].mxu0 %v150
    %v245 = vpop.f32.mrb[0].mxu0
    %v246 = vadd.f32 %v117, %v245
    %v247 = vpop.f32.mrb[0].mxu0
    %248 = vmatprep.mubr.f32.mxu0 0.0
    %249 = vmatmul.mubr.f32.gmra.mrb[0].mxu0 %v153
    %v250 = vpop.f32.mrb[0].mxu0
    %v251 = vadd.f32 %v122, %v250
    %v252 = vpop.f32.mrb[0].mxu0
    %253 = vmatprep.mubr.f32.mxu0 0.0
    %254 = vmatmul.mubr.f32.gmra.mrb[0].mxu0 %v156
    %v255 = vpop.f32.mrb[0].mxu0
    %v256 = vadd.f32 %v127, %v255
    %v257 = vpop.f32.mrb[0].mxu0
    %258 = vmatprep.mubr.f32.mxu0 0.0
    %259 = vmatmul.mubr.f32.gmra.mrb[0].mxu0 %v159
    %v260 = vpop.f32.mrb[0].mxu0
    %v261 = vadd.f32 %v132, %v260
    %v262 = vpop.f32.mrb[0].mxu0
    %263 = vmatprep.mubr.f32.mxu0 0.0
    %264 = vmatmul.mubr.f32.gmra.mrb[0].mxu0 %v162
    %v265 = vpop.f32.mrb[0].mxu0
    %v266 = vadd.f32 %v137, %v265
    %v267 = vpop.f32.mrb[0].mxu0
    %268 = vdwg.mxu0
    %v269 = vmax.f32 %v231, 0.0
    %v270 = vmax.f32 %v236, 0.0
    %v271 = vmax.f32 %v241, 0.0
    %v272 = vmax.f32 %v246, 0.0
    %v273 = vmax.f32 %v251, 0.0
    %v274 = vmax.f32 %v256, 0.0
    %v275 = vmax.f32 %v261, 0.0
    %v276 = vmax.f32 %v266, 0.0
    %v277 = vld [vmem:[#allocation6] sm:$0xff]
    %v278 = vld [vmem:[#allocation6 + $0x8] sm:$0xff]
    %v279 = vld [vmem:[#allocation6 + $0x10] sm:$0xff]
    %v280 = vld [vmem:[#allocation6 + $0x18] sm:$0xff]
    %v281 = vld [vmem:[#allocation6 + $0x20] sm:$0xff]
    %v282 = vld [vmem:[#allocation6 + $0x28] sm:$0xff]
    %v283 = vld [vmem:[#allocation6 + $0x30] sm:$0xff]
    %v284 = vld [vmem:[#allocation6 + $0x38] sm:$0xff]
    %v285 = vld [vmem:[#allocation7] sm:$0xff]
    %v286 = vld [vmem:[#allocation7 + $0x8] sm:$0xff]
    %v287 = vld [vmem:[#allocation7 + $0x10] sm:$0xff]
    %v288 = vld [vmem:[#allocation7 + $0x18] sm:$0xff]
    %v289 = vld [vmem:[#allocation7 + $0x20] sm:$0xff]
    %v290 = vld [vmem:[#allocation7 + $0x28] sm:$0xff]
    %v291 = vld [vmem:[#allocation7 + $0x30] sm:$0xff]
    %v292 = vld [vmem:[#allocation7 + $0x38] sm:$0xff]
    %294 = vset.pattern.permute.xlu0 0
    %295 = vperm.xlu0 %294, %v285
    %v296 = vpop.permute.xlu0 %295
    %299 = vset.pattern.permute.xlu0 0
    %300 = vperm.xlu0 %299, %v286
    %v301 = vpop.permute.xlu0 %300
    %304 = vset.pattern.permute.xlu0 0
    %305 = vperm.xlu0 %304, %v287
    %v306 = vpop.permute.xlu0 %305
    %309 = vset.pattern.permute.xlu0 0
    %310 = vperm.xlu0 %309, %v288
    %v311 = vpop.permute.xlu0 %310
    %314 = vset.pattern.permute.xlu0 0
    %315 = vperm.xlu0 %314, %v289
    %v316 = vpop.permute.xlu0 %315
    %319 = vset.pattern.permute.xlu0 0
    %320 = vperm.xlu0 %319, %v290
    %v321 = vpop.permute.xlu0 %320
    %324 = vset.pattern.permute.xlu0 0
    %325 = vperm.xlu0 %324, %v291
    %v326 = vpop.permute.xlu0 %325
    %329 = vset.pattern.permute.xlu0 0
    %330 = vperm.xlu0 %329, %v292
    %v331 = vpop.permute.xlu0 %330
    %vm333 = vcmask 523264
    %v335 = vsel %vm333, %v277, 0
    %v338 = vsel %vm333, %v278, 0
    %v341 = vsel %vm333, %v279, 0
    %v344 = vsel %vm333, %v280, 0
    %v347 = vsel %vm333, %v281, 0
    %v350 = vsel %vm333, %v282, 0
    %v353 = vsel %vm333, %v283, 0
    %v356 = vsel %vm333, %v284, 0
    %358 = vmatprep.subr.mxu0 0.0
    %359 = vmatpush1.msra.mxu0 %v269
    %360 = vmatprep.subr.mxu0 0.0
    %361 = vmatpush1.msra.mxu0 %v270
    %362 = vmatprep.subr.mxu0 0.0
    %363 = vmatpush1.msra.mxu0 %v271
    %364 = vmatprep.subr.mxu0 0.0
    %365 = vmatpush1.msra.mxu0 %v272
    %366 = vmatprep.subr.mxu0 0.0
    %367 = vmatpush1.msra.mxu0 %v273
    %368 = vmatprep.subr.mxu0 0.0
    %369 = vmatpush1.msra.mxu0 %v274
    %370 = vmatprep.subr.mxu0 0.0
    %371 = vmatpush1.msra.mxu0 %v275
    %372 = vmatprep.subr.mxu0 0.0
    %373 = vmatpush1.msra.mxu0 %v276
    %374 = vmatprep.subr.mxu0 0.0
    %375 = vmatpush1.msra.mxu0 0.0
    %376 = vmatprep.subr.mxu0 0.0
    %377 = vmatpush1.msra.mxu0 0.0
    %378 = vmatprep.subr.mxu0 0.0
    %379 = vmatpush1.msra.mxu0 0.0
    %380 = vmatprep.subr.mxu0 0.0
    %381 = vmatpush1.msra.mxu0 0.0
    %382 = vmatprep.subr.mxu0 0.0
    %383 = vmatpush1.msra.mxu0 0.0
    %384 = vmatprep.subr.mxu0 0.0
    %385 = vmatpush1.msra.mxu0 0.0
    %386 = vmatprep.subr.mxu0 0.0
    %387 = vmatpush1.msra.mxu0 0.0
    %388 = vmatprep.subr.mxu0 0.0
    %389 = vmatpush1.msra.mxu0 0.0
    %390 = vmatprep.subr.mxu0 0.0
    %391 = vmatpush1.msra.mxu0 0.0
    %392 = vmatprep.subr.mxu0 0.0
    %393 = vmatpush1.msra.mxu0 0.0
    %394 = vmatprep.subr.mxu0 0.0
    %395 = vmatpush1.msra.mxu0 0.0
    %396 = vmatprep.subr.mxu0 0.0
    %397 = vmatpush1.msra.mxu0 0.0
    %398 = vmatprep.subr.mxu0 0.0
    %399 = vmatpush1.msra.mxu0 0.0
    %400 = vmatprep.subr.mxu0 0.0
    %401 = vmatpush1.msra.mxu0 0.0
    %402 = vmatprep.subr.mxu0 0.0
    %403 = vmatpush1.msra.mxu0 0.0
    %404 = vmatprep.subr.mxu0 0.0
    %405 = vmatpush1.msra.mxu0 0.0
    %406 = vmatprep.subr.mxu0 0.0
    %407 = vmatpush1.msra.mxu0 0.0
    %408 = vmatprep.subr.mxu0 0.0
    %409 = vmatpush1.msra.mxu0 0.0
    %410 = vmatprep.subr.mxu0 0.0
    %411 = vmatpush1.msra.mxu0 0.0
    %412 = vmatprep.subr.mxu0 0.0
    %413 = vmatpush1.msra.mxu0 0.0
    %414 = vmatprep.subr.mxu0 0.0
    %415 = vmatpush1.msra.mxu0 0.0
    %416 = vmatprep.subr.mxu0 0.0
    %417 = vmatpush1.msra.mxu0 0.0
    %418 = vmatprep.subr.mxu0 0.0
    %419 = vmatpush1.msra.mxu0 0.0
    %420 = vmatprep.subr.mxu0 0.0
    %421 = vmatpush1.msra.mxu0 0.0
    %422 = vmatprep.mubr.f32.mxu0 0.0
    %423 = vmatmul.mubr.f32.gmra.mrb[0].mxu0 %v335
    %v424 = vpop.f32.mrb[0].mxu0
    %v425 = vadd.f32 %v296, %v424
    %v426 = vpop.f32.mrb[0].mxu0
    %427 = vmatprep.mubr.f32.mxu0 0.0
    %428 = vmatmul.mubr.f32.gmra.mrb[0].mxu0 %v338
    %v429 = vpop.f32.mrb[0].mxu0
    %v430 = vadd.f32 %v301, %v429
    %v431 = vpop.f32.mrb[0].mxu0
    %432 = vmatprep.mubr.f32.mxu0 0.0
    %433 = vmatmul.mubr.f32.gmra.mrb[0].mxu0 %v341
    %v434 = vpop.f32.mrb[0].mxu0
    %v435 = vadd.f32 %v306, %v434
    %v436 = vpop.f32.mrb[0].mxu0
    %437 = vmatprep.mubr.f32.mxu0 0.0
    %438 = vmatmul.mubr.f32.gmra.mrb[0].mxu0 %v344
    %v439 = vpop.f32.mrb[0].mxu0
    %v440 = vadd.f32 %v311, %v439
    %v441 = vpop.f32.mrb[0].mxu0
    %442 = vmatprep.mubr.f32.mxu0 0.0
    %443 = vmatmul.mubr.f32.gmra.mrb[0].mxu0 %v347
    %v444 = vpop.f32.mrb[0].mxu0
    %v445 = vadd.f32 %v316, %v444
    %v446 = vpop.f32.mrb[0].mxu0
    %447 = vmatprep.mubr.f32.mxu0 0.0
    %448 = vmatmul.mubr.f32.gmra.mrb[0].mxu0 %v350
    %v449 = vpop.f32.mrb[0].mxu0
    %v450 = vadd.f32 %v321, %v449
    %v451 = vpop.f32.mrb[0].mxu0
    %452 = vmatprep.mubr.f32.mxu0 0.0
    %453 = vmatmul.mubr.f32.gmra.mrb[0].mxu0 %v353
    %v454 = vpop.f32.mrb[0].mxu0
    %v455 = vadd.f32 %v326, %v454
    %v456 = vpop.f32.mrb[0].mxu0
    %457 = vmatprep.mubr.f32.mxu0 0.0
    %458 = vmatmul.mubr.f32.gmra.mrb[0].mxu0 %v356
    %v459 = vpop.f32.mrb[0].mxu0
    %v460 = vadd.f32 %v331, %v459
    %v461 = vpop.f32.mrb[0].mxu0
    %462 = vdwg.mxu0
    %v463 = vmax.f32 %v425, 0.0
    %v464 = vmax.f32 %v430, 0.0
    %v465 = vmax.f32 %v435, 0.0
    %v466 = vmax.f32 %v440, 0.0
    %v467 = vmax.f32 %v445, 0.0
    %v468 = vmax.f32 %v450, 0.0
    %v469 = vmax.f32 %v455, 0.0
    %v470 = vmax.f32 %v460, 0.0
    %v471 = vld [vmem:[%s5] sm:$0xff]
    %v472 = vld [vmem:[%s6] sm:$0xff]
    %474 = vset.pattern.permute.xlu0 0
    %475 = vperm.xlu0 %474, %v472
    %v476 = vpop.permute.xlu0 %475
    %v479 = vsel %vm333, %v471, 0
    %481 = vmatprep.subr.mxu0 0.0
    %482 = vmatpush1.msra.mxu0 %v463
    %483 = vmatprep.subr.mxu0 0.0
    %484 = vmatpush1.msra.mxu0 %v464
    %485 = vmatprep.subr.mxu0 0.0
    %486 = vmatpush1.msra.mxu0 %v465
    %487 = vmatprep.subr.mxu0 0.0
    %488 = vmatpush1.msra.mxu0 %v466
    %489 = vmatprep.subr.mxu0 0.0
    %490 = vmatpush1.msra.mxu0 %v467
    %491 = vmatprep.subr.mxu0 0.0
    %492 = vmatpush1.msra.mxu0 %v468
    %493 = vmatprep.subr.mxu0 0.0
    %494 = vmatpush1.msra.mxu0 %v469
    %495 = vmatprep.subr.mxu0 0.0
    %496 = vmatpush1.msra.mxu0 %v470
    %497 = vmatprep.subr.mxu0 0.0
    %498 = vmatpush1.msra.mxu0 0.0
    %499 = vmatprep.subr.mxu0 0.0
    %500 = vmatpush1.msra.mxu0 0.0
    %501 = vmatprep.subr.mxu0 0.0
    %502 = vmatpush1.msra.mxu0 0.0
    %503 = vmatprep.subr.mxu0 0.0
    %504 = vmatpush1.msra.mxu0 0.0
    %505 = vmatprep.subr.mxu0 0.0
    %506 = vmatpush1.msra.mxu0 0.0
    %507 = vmatprep.subr.mxu0 0.0
    %508 = vmatpush1.msra.mxu0 0.0
    %509 = vmatprep.subr.mxu0 0.0
    %510 = vmatpush1.msra.mxu0 0.0
    %511 = vmatprep.subr.mxu0 0.0
    %512 = vmatpush1.msra.mxu0 0.0
    %513 = vmatprep.subr.mxu0 0.0
    %514 = vmatpush1.msra.mxu0 0.0
    %515 = vmatprep.subr.mxu0 0.0
    %516 = vmatpush1.msra.mxu0 0.0
    %517 = vmatprep.subr.mxu0 0.0
    %518 = vmatpush1.msra.mxu0 0.0
    %519 = vmatprep.subr.mxu0 0.0
    %520 = vmatpush1.msra.mxu0 0.0
    %521 = vmatprep.subr.mxu0 0.0
    %522 = vmatpush1.msra.mxu0 0.0
    %523 = vmatprep.subr.mxu0 0.0
    %524 = vmatpush1.msra.mxu0 0.0
    %525 = vmatprep.subr.mxu0 0.0
    %526 = vmatpush1.msra.mxu0 0.0
    %527 = vmatprep.subr.mxu0 0.0
    %528 = vmatpush1.msra.mxu0 0.0
    %529 = vmatprep.subr.mxu0 0.0
    %530 = vmatpush1.msra.mxu0 0.0
    %531 = vmatprep.subr.mxu0 0.0
    %532 = vmatpush1.msra.mxu0 0.0
    %533 = vmatprep.subr.mxu0 0.0
    %534 = vmatpush1.msra.mxu0 0.0
    %535 = vmatprep.subr.mxu0 0.0
    %536 = vmatpush1.msra.mxu0 0.0
    %537 = vmatprep.subr.mxu0 0.0
    %538 = vmatpush1.msra.mxu0 0.0
    %539 = vmatprep.subr.mxu0 0.0
    %540 = vmatpush1.msra.mxu0 0.0
    %541 = vmatprep.subr.mxu0 0.0
    %542 = vmatpush1.msra.mxu0 0.0
    %543 = vmatprep.subr.mxu0 0.0
    %544 = vmatpush1.msra.mxu0 0.0
    %545 = vmatprep.mubr.f32.mxu0 0.0
    %546 = vmatmul.mubr.f32.gmra.mrb[0].mxu0 %v479
    %v547 = vpop.f32.mrb[0].mxu0
    %v548 = vadd.f32 %v476, %v547
    %v549 = vpop.f32.mrb[0].mxu0
    %550 = vdwg.mxu0
    %551 = vst [vmem:[%s7] sm:$0xff] %v548
    // Predicated region
    $region46: #{_lambda_.1} parent=1 // pred_check
      _
    $region47: #{_lambda_.1} parent=1 // pred_check_branch
      %553 = sbr.rel (0) target = $region49
    $region48: #{_lambda_.1} parent=1 // pred_region
      _
    $region49: #{_lambda_.1} parent=1 // pred_fallthru
      _
    // Predicated region
    $region50: #{_lambda_.1} parent=1 // pred_check
      _
    $region51: #{_lambda_.1} parent=1 // pred_check_branch
      %555 = sbr.rel (0) target = $region53
    $region52: #{_lambda_.1} parent=1 // pred_region
      _
    $region53: #{_lambda_.1} parent=1 // pred_fallthru
      _
    %556 = vsyncpa [#allocation3], 1
    %557 = vsyncpa [#allocation5], 1
    %558 = vsyncpa [#allocation8], 1

</llo_original>
